<compile_context>
chip_gen: v7x
topology: tpu7x:2x2x1
jax: 0.10.0
libtpu: 0.0.40
codegen_flags: <defaults>
</compile_context>

<pallas_src>
import math
import functools

import jax
import jax.numpy as jnp
from jax.experimental import pallas as pl
from jax.experimental.pallas import tpu as pltpu

SUBLANE = 8


def _round_up(v, m):
    return (v + m - 1) // m * m


def _leaky_relu(x, negative_slope=0.01):
    # max(x, slope*x) == leaky_relu(x) for 0 < slope < 1; cheaper than where().
    return jnp.maximum(x, negative_slope * x)


def mlp_kernel(x_ref,
               w0_ref, b0_ref, w1_ref, b1_ref, w2_ref, b2_ref,
               w3_ref, b3_ref, w4_ref, b4_ref, w5_ref, b5_ref,
               o_ref):
    # 6 matmuls with f32 accumulation + bias + leaky_relu, all on the current batch tile.
    h = x_ref[...]
    for w_ref, b_ref in ((w0_ref, b0_ref), (w1_ref, b1_ref), (w2_ref, b2_ref),
                         (w3_ref, b3_ref), (w4_ref, b4_ref)):
        a = jnp.dot(h, w_ref[...], preferred_element_type=jnp.float32) + b_ref[...]
        h = _leaky_relu(a)
        # dropout (eval mode): identity
    # predict layer: no activation.
    o_ref[...] = jnp.dot(h, w5_ref[...], preferred_element_type=jnp.float32) + b5_ref[...]


def net_forward(x, params, *, max_tile_b=8192):
    """x: (B, n_features) f32. params: list of (W, b) with W shaped (in, out)."""
    B, F = x.shape
    n_output = params[-1][0].shape[1]

    # --- adaptive batch tiling (sublane dim of every matmul) ------------------------
    # steps = ceil(B / max_tile_b); tile_b = round_up(ceil(B / steps), 8)
    # => single step (with <= 7 padded rows) for small B; near-equal tiles for large B.
    steps = max(1, -(-B // max_tile_b))
    tile_b = _round_up(-(-B // steps), SUBLANE)
    b_pad = steps * tile_b
    if b_pad != B:
        x = jnp.pad(x, ((0, b_pad - B), (0, 0)))

    # --- flatten args: x, then (W f32 (in,out), b f32 (1,out)) per layer -------------
    flat_args = [x]
    for w, b in params:
        flat_args.append(w.astype(jnp.float32))
        flat_args.append(b.reshape(1, -1).astype(jnp.float32))

    in_specs = [pl.BlockSpec((tile_b, F), lambda i: (i, 0))]
    for a in flat_args[1:]:
        # Constant index_map -> block stays resident in VMEM across grid steps.
        in_specs.append(pl.BlockSpec(a.shape, lambda i: (0, 0)))
    # Out block last dim equals the full array dim (no 128-pad); masked vst is negligible.
    out_spec = pl.BlockSpec((tile_b, n_output), lambda i: (i, 0))

    flops = 2 * b_pad * sum(w.shape[0] * w.shape[1] for w, _ in params)
    bytes_accessed = (x.size * 4
                      + sum(w.size * 4 + b.size * 4 for w, b in params)
                      + b_pad * n_output * 4)

    out = pl.pallas_call(
        mlp_kernel,
        out_shape=jax.ShapeDtypeStruct((b_pad, n_output), jnp.float32),
        grid=(steps,),
        in_specs=in_specs,
        out_specs=out_spec,
        compiler_params=pltpu.CompilerParams(
            dimension_semantics=("parallel",)),      # v7x: shard batch tiles over 2 TCs
        cost_estimate=pl.CostEstimate(
            flops=flops, transcendentals=0, bytes_accessed=bytes_accessed),
    )(*flat_args)

    return out[:B, :]


def net_forward_ref(x, params):
    """Pure-JAX f32 reference (eval-mode dropout = identity)."""
    h = x
    for w, b in params[:-1]:
        h = _leaky_relu(h @ w + b)
    w, b = params[-1]
    return h @ w + b


def init_params(key, n_features, hidden_sizes, n_output):
    """Deterministic init mirroring initialize_weights:
    xavier_uniform with leaky_relu gain for W, PyTorch-default uniform for b."""
    assert len(hidden_sizes) == 5
    sizes = [n_features] + list(hidden_sizes) + [n_output]
    gain = math.sqrt(2.0 / (1.0 + 0.01 ** 2))  # calculate_gain('leaky_relu')
    params = []
    for i in range(len(sizes) - 1):
        fan_in, fan_out = sizes[i], sizes[i + 1]
        key, kw, kb = jax.random.split(key, 3)
        limit_w = gain * math.sqrt(6.0 / (fan_in + fan_out))
        w = jax.random.uniform(kw, (fan_in, fan_out), jnp.float32,
                               minval=-limit_w, maxval=limit_w)
        limit_b = 1.0 / math.sqrt(fan_in)
        b = jax.random.uniform(kb, (fan_out,), jnp.float32,
                               minval=-limit_b, maxval=limit_b)
        params.append((w, b))
    return params


if __name__ == "__main__":
    key = jax.random.PRNGKey(0)
    k_in, k_in2, k_par = jax.random.split(key, 3)

    n_features = 16
    hidden_sizes = [32, 32, 32, 32, 32]
    n_output = 4
    params = init_params(k_par, n_features, hidden_sizes, n_output)

    fwd = jax.jit(functools.partial(net_forward, max_tile_b=8192))

    # Small case: single grid step, tile_b = 8.
    batch = 8
    x = jax.random.normal(k_in, (batch, n_features), jnp.float32)
    out = fwd(x, params)
    jax.block_until_ready(out)
    assert out.shape == (batch, n_output)
    ref = net_forward_ref(x, params)
    assert jnp.allclose(out, ref, rtol=1e-1, atol=1e-1), "small-case mismatch vs f32 reference"

    # Non-8-aligned batch: single step now (tile_b = 520, zero padding).
    batch2 = 520
    x2 = jax.random.normal(k_in2, (batch2, n_features), jnp.float32)
    out2 = fwd(x2, params)
    jax.block_until_ready(out2)
    assert out2.shape == (batch2, n_output)
    ref2 = net_forward_ref(x2, params)
    assert jnp.allclose(out2, ref2, rtol=1e-1, atol=1e-1), "large-case mismatch vs f32 reference"

    # Force the multi-step (batch > max_tile_b) path at small shapes: 3 parallel tiles.
    fwd_multi = jax.jit(functools.partial(net_forward, max_tile_b=192))
    out3 = fwd_multi(x2, params)
    jax.block_until_ready(out3)
    assert out3.shape == (batch2, n_output)
    assert jnp.allclose(out3, ref2, rtol=1e-1, atol=1e-1), "multi-step mismatch vs f32 reference"

    print("KERNEL_OK")
</pallas_src>

<mosaic_0001>
module attributes {stable_mosaic.version = 11 : i64} {
  func.func @mlp_kernel(%arg0: i32, %arg1: memref<8x16xf32, #tpu.memory_space<vmem>>, %arg2: memref<16x32xf32, #tpu.memory_space<vmem>>, %arg3: memref<1x32xf32, #tpu.memory_space<vmem>>, %arg4: memref<32x32xf32, #tpu.memory_space<vmem>>, %arg5: memref<1x32xf32, #tpu.memory_space<vmem>>, %arg6: memref<32x32xf32, #tpu.memory_space<vmem>>, %arg7: memref<1x32xf32, #tpu.memory_space<vmem>>, %arg8: memref<32x32xf32, #tpu.memory_space<vmem>>, %arg9: memref<1x32xf32, #tpu.memory_space<vmem>>, %arg10: memref<32x32xf32, #tpu.memory_space<vmem>>, %arg11: memref<1x32xf32, #tpu.memory_space<vmem>>, %arg12: memref<32x4xf32, #tpu.memory_space<vmem>>, %arg13: memref<1x4xf32, #tpu.memory_space<vmem>>, %arg14: memref<8x4xf32, #tpu.memory_space<vmem>>) attributes {dimension_semantics = [#tpu.dimension_semantics<parallel>], iteration_bounds = array<i64: 1>, scalar_prefetch = 0 : i64, scratch_operands = 0 : i64, tpu.core_type = #tpu.core_type<tc>, window_params = [{transform_indices = @transform_0, window_bounds = array<i64: 8, 16>}, {pipeline_mode = #tpu.pipeline_mode<synchronous>, transform_indices = @transform_1, window_bounds = array<i64: 16, 32>}, {pipeline_mode = #tpu.pipeline_mode<synchronous>, transform_indices = @transform_2, window_bounds = array<i64: 1, 32>}, {pipeline_mode = #tpu.pipeline_mode<synchronous>, transform_indices = @transform_3, window_bounds = array<i64: 32, 32>}, {pipeline_mode = #tpu.pipeline_mode<synchronous>, transform_indices = @transform_4, window_bounds = array<i64: 1, 32>}, {pipeline_mode = #tpu.pipeline_mode<synchronous>, transform_indices = @transform_5, window_bounds = array<i64: 32, 32>}, {pipeline_mode = #tpu.pipeline_mode<synchronous>, transform_indices = @transform_6, window_bounds = array<i64: 1, 32>}, {pipeline_mode = #tpu.pipeline_mode<synchronous>, transform_indices = @transform_7, window_bounds = array<i64: 32, 32>}, {pipeline_mode = #tpu.pipeline_mode<synchronous>, transform_indices = @transform_8, window_bounds = array<i64: 1, 32>}, {pipeline_mode = #tpu.pipeline_mode<synchronous>, transform_indices = @transform_9, window_bounds = array<i64: 32, 32>}, {pipeline_mode = #tpu.pipeline_mode<synchronous>, transform_indices = @transform_10, window_bounds = array<i64: 1, 32>}, {pipeline_mode = #tpu.pipeline_mode<synchronous>, transform_indices = @transform_11, window_bounds = array<i64: 32, 4>}, {pipeline_mode = #tpu.pipeline_mode<synchronous>, transform_indices = @transform_12, window_bounds = array<i64: 1, 4>}, {transform_indices = @transform_13, window_bounds = array<i64: 8, 4>}]} {
    %c0 = arith.constant 0 : index
    %c0_0 = arith.constant 0 : index
    %0 = vector.load %arg1[%c0, %c0_0] : memref<8x16xf32, #tpu.memory_space<vmem>>, vector<8x16xf32>
    %c0_1 = arith.constant 0 : index
    %c0_2 = arith.constant 0 : index
    %1 = vector.load %arg2[%c0_1, %c0_2] : memref<16x32xf32, #tpu.memory_space<vmem>>, vector<16x32xf32>
    %cst = arith.constant dense<0.000000e+00> : vector<8x32xf32>
    %2 = tpu.matmul %0, %1, %cst {dimension_numbers = #tpu.dot_dimension_numbers<[1], [0], [0], [1], [0, 0, 1, 1], [], []>} : vector<8x16xf32>, vector<16x32xf32>, vector<8x32xf32> -> vector<8x32xf32>
    %c0_3 = arith.constant 0 : index
    %c0_4 = arith.constant 0 : index
    %3 = vector.load %arg3[%c0_3, %c0_4] : memref<1x32xf32, #tpu.memory_space<vmem>>, vector<1x32xf32>
    %4 = vector.broadcast %3 : vector<1x32xf32> to vector<8x32xf32>
    %5 = arith.addf %2, %4 : vector<8x32xf32>
    %cst_5 = arith.constant 0.00999999977 : f32
    %6 = vector.broadcast %cst_5 : f32 to vector<8x32xf32>
    %7 = arith.mulf %6, %5 : vector<8x32xf32>
    %8 = arith.maximumf %5, %7 : vector<8x32xf32>
    %c0_6 = arith.constant 0 : index
    %c0_7 = arith.constant 0 : index
    %9 = vector.load %arg4[%c0_6, %c0_7] : memref<32x32xf32, #tpu.memory_space<vmem>>, vector<32x32xf32>
    %cst_8 = arith.constant dense<0.000000e+00> : vector<8x32xf32>
    %10 = tpu.matmul %8, %9, %cst_8 {dimension_numbers = #tpu.dot_dimension_numbers<[1], [0], [0], [1], [0, 0, 1, 1], [], []>} : vector<8x32xf32>, vector<32x32xf32>, vector<8x32xf32> -> vector<8x32xf32>
    %c0_9 = arith.constant 0 : index
    %c0_10 = arith.constant 0 : index
    %11 = vector.load %arg5[%c0_9, %c0_10] : memref<1x32xf32, #tpu.memory_space<vmem>>, vector<1x32xf32>
    %12 = vector.broadcast %11 : vector<1x32xf32> to vector<8x32xf32>
    %13 = arith.addf %10, %12 : vector<8x32xf32>
    %cst_11 = arith.constant 0.00999999977 : f32
    %14 = vector.broadcast %cst_11 : f32 to vector<8x32xf32>
    %15 = arith.mulf %14, %13 : vector<8x32xf32>
    %16 = arith.maximumf %13, %15 : vector<8x32xf32>
    %c0_12 = arith.constant 0 : index
    %c0_13 = arith.constant 0 : index
    %17 = vector.load %arg6[%c0_12, %c0_13] : memref<32x32xf32, #tpu.memory_space<vmem>>, vector<32x32xf32>
    %cst_14 = arith.constant dense<0.000000e+00> : vector<8x32xf32>
    %18 = tpu.matmul %16, %17, %cst_14 {dimension_numbers = #tpu.dot_dimension_numbers<[1], [0], [0], [1], [0, 0, 1, 1], [], []>} : vector<8x32xf32>, vector<32x32xf32>, vector<8x32xf32> -> vector<8x32xf32>
    %c0_15 = arith.constant 0 : index
    %c0_16 = arith.constant 0 : index
    %19 = vector.load %arg7[%c0_15, %c0_16] : memref<1x32xf32, #tpu.memory_space<vmem>>, vector<1x32xf32>
    %20 = vector.broadcast %19 : vector<1x32xf32> to vector<8x32xf32>
    %21 = arith.addf %18, %20 : vector<8x32xf32>
    %cst_17 = arith.constant 0.00999999977 : f32
    %22 = vector.broadcast %cst_17 : f32 to vector<8x32xf32>
    %23 = arith.mulf %22, %21 : vector<8x32xf32>
    %24 = arith.maximumf %21, %23 : vector<8x32xf32>
    %c0_18 = arith.constant 0 : index
    %c0_19 = arith.constant 0 : index
    %25 = vector.load %arg8[%c0_18, %c0_19] : memref<32x32xf32, #tpu.memory_space<vmem>>, vector<32x32xf32>
    %cst_20 = arith.constant dense<0.000000e+00> : vector<8x32xf32>
    %26 = tpu.matmul %24, %25, %cst_20 {dimension_numbers = #tpu.dot_dimension_numbers<[1], [0], [0], [1], [0, 0, 1, 1], [], []>} : vector<8x32xf32>, vector<32x32xf32>, vector<8x32xf32> -> vector<8x32xf32>
    %c0_21 = arith.constant 0 : index
    %c0_22 = arith.constant 0 : index
    %27 = vector.load %arg9[%c0_21, %c0_22] : memref<1x32xf32, #tpu.memory_space<vmem>>, vector<1x32xf32>
    %28 = vector.broadcast %27 : vector<1x32xf32> to vector<8x32xf32>
    %29 = arith.addf %26, %28 : vector<8x32xf32>
    %cst_23 = arith.constant 0.00999999977 : f32
    %30 = vector.broadcast %cst_23 : f32 to vector<8x32xf32>
    %31 = arith.mulf %30, %29 : vector<8x32xf32>
    %32 = arith.maximumf %29, %31 : vector<8x32xf32>
    %c0_24 = arith.constant 0 : index
    %c0_25 = arith.constant 0 : index
    %33 = vector.load %arg10[%c0_24, %c0_25] : memref<32x32xf32, #tpu.memory_space<vmem>>, vector<32x32xf32>
    %cst_26 = arith.constant dense<0.000000e+00> : vector<8x32xf32>
    %34 = tpu.matmul %32, %33, %cst_26 {dimension_numbers = #tpu.dot_dimension_numbers<[1], [0], [0], [1], [0, 0, 1, 1], [], []>} : vector<8x32xf32>, vector<32x32xf32>, vector<8x32xf32> -> vector<8x32xf32>
    %c0_27 = arith.constant 0 : index
    %c0_28 = arith.constant 0 : index
    %35 = vector.load %arg11[%c0_27, %c0_28] : memref<1x32xf32, #tpu.memory_space<vmem>>, vector<1x32xf32>
    %36 = vector.broadcast %35 : vector<1x32xf32> to vector<8x32xf32>
    %37 = arith.addf %34, %36 : vector<8x32xf32>
    %cst_29 = arith.constant 0.00999999977 : f32
    %38 = vector.broadcast %cst_29 : f32 to vector<8x32xf32>
    %39 = arith.mulf %38, %37 : vector<8x32xf32>
    %40 = arith.maximumf %37, %39 : vector<8x32xf32>
    %c0_30 = arith.constant 0 : index
    %c0_31 = arith.constant 0 : index
    %41 = vector.load %arg12[%c0_30, %c0_31] : memref<32x4xf32, #tpu.memory_space<vmem>>, vector<32x4xf32>
    %cst_32 = arith.constant dense<0.000000e+00> : vector<8x4xf32>
    %42 = tpu.matmul %40, %41, %cst_32 {dimension_numbers = #tpu.dot_dimension_numbers<[1], [0], [0], [1], [0, 0, 1, 1], [], []>} : vector<8x32xf32>, vector<32x4xf32>, vector<8x4xf32> -> vector<8x4xf32>
    %c0_33 = arith.constant 0 : index
    %c0_34 = arith.constant 0 : index
    %43 = vector.load %arg13[%c0_33, %c0_34] : memref<1x4xf32, #tpu.memory_space<vmem>>, vector<1x4xf32>
    %44 = vector.broadcast %43 : vector<1x4xf32> to vector<8x4xf32>
    %45 = arith.addf %42, %44 : vector<8x4xf32>
    %c0_35 = arith.constant 0 : index
    %c0_36 = arith.constant 0 : index
    %46 = vector.load %arg14[%c0_35, %c0_36] : memref<8x4xf32, #tpu.memory_space<vmem>>, vector<8x4xf32>
    tpu.vector_store %arg14[%c0_35, %c0_36], %45 {strides = array<i32>} : memref<8x4xf32, #tpu.memory_space<vmem>>, vector<8x4xf32>,
    return
  }
  func.func @transform_0(%arg0: i32) -> (i32, i32) {
    %c0_i32 = arith.constant 0 : i32
    %c0_i32_0 = arith.constant 0 : i32
    return %arg0, %c0_i32 : i32, i32
  }
  func.func @transform_1(%arg0: i32) -> (i32, i32) {
    %c0_i32 = arith.constant 0 : i32
    %c0_i32_0 = arith.constant 0 : i32
    %c0_i32_1 = arith.constant 0 : i32
    return %c0_i32, %c0_i32_0 : i32, i32
  }
  func.func @transform_2(%arg0: i32) -> (i32, i32) {
    %c0_i32 = arith.constant 0 : i32
    %c0_i32_0 = arith.constant 0 : i32
    %c0_i32_1 = arith.constant 0 : i32
    return %c0_i32, %c0_i32_0 : i32, i32
  }
  func.func @transform_3(%arg0: i32) -> (i32, i32) {
    %c0_i32 = arith.constant 0 : i32
    %c0_i32_0 = arith.constant 0 : i32
    %c0_i32_1 = arith.constant 0 : i32
    return %c0_i32, %c0_i32_0 : i32, i32
  }
  func.func @transform_4(%arg0: i32) -> (i32, i32) {
    %c0_i32 = arith.constant 0 : i32
    %c0_i32_0 = arith.constant 0 : i32
    %c0_i32_1 = arith.constant 0 : i32
    return %c0_i32, %c0_i32_0 : i32, i32
  }
  func.func @transform_5(%arg0: i32) -> (i32, i32) {
    %c0_i32 = arith.constant 0 : i32
    %c0_i32_0 = arith.constant 0 : i32
    %c0_i32_1 = arith.constant 0 : i32
    return %c0_i32, %c0_i32_0 : i32, i32
  }
  func.func @transform_6(%arg0: i32) -> (i32, i32) {
    %c0_i32 = arith.constant 0 : i32
    %c0_i32_0 = arith.constant 0 : i32
    %c0_i32_1 = arith.constant 0 : i32
    return %c0_i32, %c0_i32_0 : i32, i32
  }
  func.func @transform_7(%arg0: i32) -> (i32, i32) {
    %c0_i32 = arith.constant 0 : i32
    %c0_i32_0 = arith.constant 0 : i32
    %c0_i32_1 = arith.constant 0 : i32
    return %c0_i32, %c0_i32_0 : i32, i32
  }
  func.func @transform_8(%arg0: i32) -> (i32, i32) {
    %c0_i32 = arith.constant 0 : i32
    %c0_i32_0 = arith.constant 0 : i32
    %c0_i32_1 = arith.constant 0 : i32
    return %c0_i32, %c0_i32_0 : i32, i32
  }
  func.func @transform_9(%arg0: i32) -> (i32, i32) {
    %c0_i32 = arith.constant 0 : i32
    %c0_i32_0 = arith.constant 0 : i32
    %c0_i32_1 = arith.constant 0 : i32
    return %c0_i32, %c0_i32_0 : i32, i32
  }
  func.func @transform_10(%arg0: i32) -> (i32, i32) {
    %c0_i32 = arith.constant 0 : i32
    %c0_i32_0 = arith.constant 0 : i32
    %c0_i32_1 = arith.constant 0 : i32
    return %c0_i32, %c0_i32_0 : i32, i32
  }
  func.func @transform_11(%arg0: i32) -> (i32, i32) {
    %c0_i32 = arith.constant 0 : i32
    %c0_i32_0 = arith.constant 0 : i32
    %c0_i32_1 = arith.constant 0 : i32
    return %c0_i32, %c0_i32_0 : i32, i32
  }
  func.func @transform_12(%arg0: i32) -> (i32, i32) {
    %c0_i32 = arith.constant 0 : i32
    %c0_i32_0 = arith.constant 0 : i32
    %c0_i32_1 = arith.constant 0 : i32
    return %c0_i32, %c0_i32_0 : i32, i32
  }
  func.func @transform_13(%arg0: i32) -> (i32, i32) {
    %c0_i32 = arith.constant 0 : i32
    %c0_i32_0 = arith.constant 0 : i32
    return %arg0, %c0_i32 : i32, i32
  }
}

</mosaic_0001>

<llo_original>
// kernel: net_forward.1
$region0: #{net_forward.1}
  #allocation0 [shape = 'u32[]', space=smem, size = 0x4, offset = 0x4, fixed_abs, tag = 'smem constant byte address 0x4 - core index']
  #allocation1 [shape = 'u32[144,128]{1,0:T(1,128)}', space=vmem, size = 0x12000, scoped, tag = 'internal scratch']
  %s0 = inlined_call_operand.hbm [shape: f32[8,16], index: 0, kind: input, shape index: {}]
  %s1 = inlined_call_operand.hbm [shape: f32[16,32], index: 1, kind: input, shape index: {}]
  %s2 = inlined_call_operand.vmem [shape: f32[1,32], index: 2, kind: input, shape index: {}]
  %s3 = inlined_call_operand.vmem [shape: f32[32,32], index: 3, kind: input, shape index: {}]
  %s4 = inlined_call_operand.vmem [shape: f32[1,32], index: 4, kind: input, shape index: {}]
  %s5 = inlined_call_operand.vmem [shape: f32[32,32], index: 5, kind: input, shape index: {}]
  %s6 = inlined_call_operand.vmem [shape: f32[1,32], index: 6, kind: input, shape index: {}]
  %s7 = inlined_call_operand.hbm [shape: f32[32,32], index: 7, kind: input, shape index: {}]
  %s8 = inlined_call_operand.vmem [shape: f32[1,32], index: 8, kind: input, shape index: {}]
  %s9 = inlined_call_operand.hbm [shape: f32[32,32], index: 9, kind: input, shape index: {}]
  %s10 = inlined_call_operand.vmem [shape: f32[1,32], index: 10, kind: input, shape index: {}]
  %s11 = inlined_call_operand.vmem [shape: f32[32,4], index: 11, kind: input, shape index: {}]
  %s12 = inlined_call_operand.vmem [shape: f32[1,4], index: 12, kind: input, shape index: {}]
  %s13 = inlined_call_operand.vmem [shape: f32[8,4], index: 13, kind: output, shape index: {}]
  %s14 = sld [smem:[#allocation0]]
  $region78: #{net_forward.1} parent=0
    _
  %s16 = ssub.s32 1, %s14
  %s17 = scalar_select 0, %s16, %s14
  $region1: #{net_forward.1} parent=0
    #allocation2 [shape = 'u8[4096]{0}', space=vmem, size = 0x1000, scoped, tag = 'input window, operand 0, single buffered']
    #allocation3 [shape = 's32[1]{0}', space=sflag, size = 0x4, scoped, tag = 'scoped memory for net_forward.1']
    #allocation4 [shape = 'u8[8192]{0}', space=vmem, size = 0x2000, scoped, tag = 'input window, operand 1, single buffered']
    #allocation5 [shape = 's32[1]{0}', space=sflag, size = 0x4, scoped, tag = 'scoped memory for net_forward.1']
    #allocation6 [shape = 'u8[16384]{0}', space=vmem, size = 0x4000, scoped, tag = 'input window, operand 7, single buffered']
    #allocation7 [shape = 'u8[16384]{0}', space=vmem, size = 0x4000, scoped, tag = 'input window, operand 9, single buffered']
    #allocation8 [shape = 's32[1]{0}', space=sflag, size = 0x4, scoped, tag = 'scoped memory for net_forward.1']
    %18 = vsyncpa [#allocation3], 0
    %19 = vsyncpa [#allocation5], 0
    %20 = vsyncpa [#allocation8], 0
    // Predicated region
    $region2: #{net_forward.1} parent=1 // pred_check
      _
    $region3: #{net_forward.1} parent=1 // pred_check_branch
      %22 = sbr.rel (0) target = $region5
    $region4: #{net_forward.1} parent=1 // pred_region
      %s24 = ssub.s32 128, 128
      %25 = vsyncadd [#allocation3], %s24
      %s27 = sshll.u32 [#allocation2], 4
      %s28 = int_to_ptr.vmem [resolvable:$true] %s27
      %30 = dma.hbm_to_vmem [thread:$0]  %s0, 128, %s28, [#allocation3]
    $region5: #{net_forward.1} parent=1 // pred_fallthru
      _
    // Predicated region
    $region6: #{net_forward.1} parent=1 // pred_check
      _
    $region7: #{net_forward.1} parent=1 // pred_check_branch
      %32 = sbr.rel (0) target = $region9
    $region8: #{net_forward.1} parent=1 // pred_region
      %s34 = ssub.s32 256, 256
      %35 = vsyncadd [#allocation5], %s34
      %s36 = sshll.u32 [#allocation4], 4
      %s37 = int_to_ptr.vmem [resolvable:$true] %s36
      %42 = dma.hbm_to_vmem [thread:$0]  %s1, 256, %s37, [#allocation5], 128, 128, 8
    $region9: #{net_forward.1} parent=1 // pred_fallthru
      _
    // Predicated region
    $region10: #{net_forward.1} parent=1 // pred_check
      _
    $region11: #{net_forward.1} parent=1 // pred_check_branch
      %44 = sbr.rel (0) target = $region13
    $region12: #{net_forward.1} parent=1 // pred_region
      _
    $region13: #{net_forward.1} parent=1 // pred_fallthru
      _
    // Predicated region
    $region14: #{net_forward.1} parent=1 // pred_check
      _
    $region15: #{net_forward.1} parent=1 // pred_check_branch
      %46 = sbr.rel (0) target = $region17
    $region16: #{net_forward.1} parent=1 // pred_region
      _
    $region17: #{net_forward.1} parent=1 // pred_fallthru
      _
    // Predicated region
    $region18: #{net_forward.1} parent=1 // pred_check
      _
    $region19: #{net_forward.1} parent=1 // pred_check_branch
      %48 = sbr.rel (0) target = $region21
    $region20: #{net_forward.1} parent=1 // pred_region
      _
    $region21: #{net_forward.1} parent=1 // pred_fallthru
      _
    // Predicated region
    $region22: #{net_forward.1} parent=1 // pred_check
      _
    $region23: #{net_forward.1} parent=1 // pred_check_branch
      %50 = sbr.rel (0) target = $region25
    $region24: #{net_forward.1} parent=1 // pred_region
      _
    $region25: #{net_forward.1} parent=1 // pred_fallthru
      _
    // Predicated region
    $region26: #{net_forward.1} parent=1 // pred_check
      _
    $region27: #{net_forward.1} parent=1 // pred_check_branch
      %52 = sbr.rel (0) target = $region29
    $region28: #{net_forward.1} parent=1 // pred_region
      _
    $region29: #{net_forward.1} parent=1 // pred_fallthru
      _
    // Predicated region
    $region30: #{net_forward.1} parent=1 // pred_check
      _
    $region31: #{net_forward.1} parent=1 // pred_check_branch
      %54 = sbr.rel (0) target = $region33
    $region32: #{net_forward.1} parent=1 // pred_region
      %s56 = ssub.s32 512, 512
      %57 = vsyncadd [#allocation5], %s56
      %s58 = sshll.u32 [#allocation6], 4
      %s59 = int_to_ptr.vmem [resolvable:$true] %s58
      %64 = dma.hbm_to_vmem [thread:$0]  %s7, 512, %s59, [#allocation5], 128, 128, 8
    $region33: #{net_forward.1} parent=1 // pred_fallthru
      _
    // Predicated region
    $region34: #{net_forward.1} parent=1 // pred_check
      _
    $region35: #{net_forward.1} parent=1 // pred_check_branch
      %66 = sbr.rel (0) target = $region37
    $region36: #{net_forward.1} parent=1 // pred_region
      _
    $region37: #{net_forward.1} parent=1 // pred_fallthru
      _
    // Predicated region
    $region38: #{net_forward.1} parent=1 // pred_check
      _
    $region39: #{net_forward.1} parent=1 // pred_check_branch
      %68 = sbr.rel (0) target = $region41
    $region40: #{net_forward.1} parent=1 // pred_region
      %s70 = ssub.s32 512, 512
      %71 = vsyncadd [#allocation8], %s70
      %s72 = sshll.u32 [#allocation7], 4
      %s73 = int_to_ptr.vmem [resolvable:$true] %s72
      %78 = dma.hbm_to_vmem [thread:$0]  %s9, 512, %s73, [#allocation8], 128, 128, 8
    $region41: #{net_forward.1} parent=1 // pred_fallthru
      _
    // Predicated region
    $region42: #{net_forward.1} parent=1 // pred_check
      _
    $region43: #{net_forward.1} parent=1 // pred_check_branch
      %80 = sbr.rel (0) target = $region45
    $region44: #{net_forward.1} parent=1 // pred_region
      _
    $region45: #{net_forward.1} parent=1 // pred_fallthru
      _
    // Predicated region
    $region46: #{net_forward.1} parent=1 // pred_check
      _
    $region47: #{net_forward.1} parent=1 // pred_check_branch
      %82 = sbr.rel (0) target = $region49
    $region48: #{net_forward.1} parent=1 // pred_region
      _
    $region49: #{net_forward.1} parent=1 // pred_fallthru
      _
    // Predicated region
    $region50: #{net_forward.1} parent=1 // pred_check
      _
    $region51: #{net_forward.1} parent=1 // pred_check_branch
      %84 = sbr.rel (0) target = $region53
    $region52: #{net_forward.1} parent=1 // pred_region
      _
    $region53: #{net_forward.1} parent=1 // pred_fallthru
      _
    // Predicated region
    $region54: #{net_forward.1} parent=1 // pred_check
      _
    $region55: #{net_forward.1} parent=1 // pred_check_branch
      %86 = sbr.rel (0) target = $region57
    $region56: #{net_forward.1} parent=1 // pred_region
      %87 = dma.done [#allocation3], 128
    $region57: #{net_forward.1} parent=1 // pred_fallthru
      _
    // Predicated region
    $region58: #{net_forward.1} parent=1 // pred_check
      _
    $region59: #{net_forward.1} parent=1 // pred_check_branch
      %89 = sbr.rel (0) target = $region61
    $region60: #{net_forward.1} parent=1 // pred_region
      %90 = dma.done [#allocation5], 256
    $region61: #{net_forward.1} parent=1 // pred_fallthru
      _
    // Predicated region
    $region62: #{net_forward.1} parent=1 // pred_check
      _
    $region63: #{net_forward.1} parent=1 // pred_check_branch
      %92 = sbr.rel (0) target = $region65
    $region64: #{net_forward.1} parent=1 // pred_region
      %93 = dma.done [#allocation5], 512
    $region65: #{net_forward.1} parent=1 // pred_fallthru
      _
    // Predicated region
    $region66: #{net_forward.1} parent=1 // pred_check
      _
    $region67: #{net_forward.1} parent=1 // pred_check_branch
      %95 = sbr.rel (0) target = $region69
    $region68: #{net_forward.1} parent=1 // pred_region
      %96 = dma.done [#allocation8], 512
    $region69: #{net_forward.1} parent=1 // pred_fallthru
      _
    %v97 = vld [vmem:[#allocation2] sm:$0xff]
    %v98 = vld [vmem:[#allocation4] sm:$0xff]
    %v99 = vld [vmem:[#allocation4 + $0x8] sm:$0xff]
    %v100 = vld [vmem:[%s2] sm:$0x1]
    %v102 = vlaneseq
    %v103 = vshrl.u32 %v102, 7
    %v104 = vsub.s32 0, %v103
    %v105 = vrot.slane %v100, %v104
    %vm107 = vcmask 130048
    %v109 = vsel %vm107, %v97, 0
    %111 = vmatprep.subr.mxu0 0.0
    %112 = vmatpush1.msra.mxu0 %v98
    %113 = vmatprep.subr.mxu0 0.0
    %114 = vmatpush1.msra.mxu0 %v99
    %115 = vmatprep.subr.mxu0 0.0
    %116 = vmatpush1.msra.mxu0 0.0
    %117 = vmatprep.subr.mxu0 0.0
    %118 = vmatpush1.msra.mxu0 0.0
    %119 = vmatprep.subr.mxu0 0.0
    %120 = vmatpush1.msra.mxu0 0.0
    %121 = vmatprep.subr.mxu0 0.0
    %122 = vmatpush1.msra.mxu0 0.0
    %123 = vmatprep.subr.mxu0 0.0
    %124 = vmatpush1.msra.mxu0 0.0
    %125 = vmatprep.subr.mxu0 0.0
    %126 = vmatpush1.msra.mxu0 0.0
    %127 = vmatprep.subr.mxu0 0.0
    %128 = vmatpush1.msra.mxu0 0.0
    %129 = vmatprep.subr.mxu0 0.0
    %130 = vmatpush1.msra.mxu0 0.0
    %131 = vmatprep.subr.mxu0 0.0
    %132 = vmatpush1.msra.mxu0 0.0
    %133 = vmatprep.subr.mxu0 0.0
    %134 = vmatpush1.msra.mxu0 0.0
    %135 = vmatprep.subr.mxu0 0.0
    %136 = vmatpush1.msra.mxu0 0.0
    %137 = vmatprep.subr.mxu0 0.0
    %138 = vmatpush1.msra.mxu0 0.0
    %139 = vmatprep.subr.mxu0 0.0
    %140 = vmatpush1.msra.mxu0 0.0
    %141 = vmatprep.subr.mxu0 0.0
    %142 = vmatpush1.msra.mxu0 0.0
    %143 = vmatprep.subr.mxu0 0.0
    %144 = vmatpush1.msra.mxu0 0.0
    %145 = vmatprep.subr.mxu0 0.0
    %146 = vmatpush1.msra.mxu0 0.0
    %147 = vmatprep.subr.mxu0 0.0
    %148 = vmatpush1.msra.mxu0 0.0
    %149 = vmatprep.subr.mxu0 0.0
    %150 = vmatpush1.msra.mxu0 0.0
    %151 = vmatprep.subr.mxu0 0.0
    %152 = vmatpush1.msra.mxu0 0.0
    %153 = vmatprep.subr.mxu0 0.0
    %154 = vmatpush1.msra.mxu0 0.0
    %155 = vmatprep.subr.mxu0 0.0
    %156 = vmatpush1.msra.mxu0 0.0
    %157 = vmatprep.subr.mxu0 0.0
    %158 = vmatpush1.msra.mxu0 0.0
    %159 = vmatprep.subr.mxu0 0.0
    %160 = vmatpush1.msra.mxu0 0.0
    %161 = vmatprep.subr.mxu0 0.0
    %162 = vmatpush1.msra.mxu0 0.0
    %163 = vmatprep.subr.mxu0 0.0
    %164 = vmatpush1.msra.mxu0 0.0
    %165 = vmatprep.subr.mxu0 0.0
    %166 = vmatpush1.msra.mxu0 0.0
    %167 = vmatprep.subr.mxu0 0.0
    %168 = vmatpush1.msra.mxu0 0.0
    %169 = vmatprep.subr.mxu0 0.0
    %170 = vmatpush1.msra.mxu0 0.0
    %171 = vmatprep.subr.mxu0 0.0
    %172 = vmatpush1.msra.mxu0 0.0
    %173 = vmatprep.subr.mxu0 0.0
    %174 = vmatpush1.msra.mxu0 0.0
    %175 = vmatprep.mubr.f32.mxu0 0.0
    %176 = vmatmul.mubr.f32.gmra.mrb[0].mxu0 %v109
    %v177 = vpop.f32.mrb[0].mxu0
    %v178 = vadd.f32 %v105, %v177
    %v179 = vpop.f32.mrb[0].mxu0
    %180 = vdwg.mxu0
    %v181 = vmul.f32 %v178, 0.01
    %v182 = vmax.f32 %v178, %v181
    %v183 = vld [vmem:[%s3] sm:$0xff]
    %v184 = vld [vmem:[%s3 + $0x8] sm:$0xff]
    %v185 = vld [vmem:[%s3 + $0x10] sm:$0xff]
    %v186 = vld [vmem:[%s3 + $0x18] sm:$0xff]
    %v187 = vld [vmem:[%s4] sm:$0x1]
    %v189 = vlaneseq
    %v190 = vshrl.u32 %v189, 7
    %v191 = vsub.s32 0, %v190
    %v192 = vrot.slane %v187, %v191
    %vm194 = vcmask 261120
    %v196 = vsel %vm194, %v182, 0
    %198 = vmatprep.subr.mxu0 0.0
    %199 = vmatpush1.msra.mxu0 %v183
    %200 = vmatprep.subr.mxu0 0.0
    %201 = vmatpush1.msra.mxu0 %v184
    %202 = vmatprep.subr.mxu0 0.0
    %203 = vmatpush1.msra.mxu0 %v185
    %204 = vmatprep.subr.mxu0 0.0
    %205 = vmatpush1.msra.mxu0 %v186
    %206 = vmatprep.subr.mxu0 0.0
    %207 = vmatpush1.msra.mxu0 0.0
    %208 = vmatprep.subr.mxu0 0.0
    %209 = vmatpush1.msra.mxu0 0.0
    %210 = vmatprep.subr.mxu0 0.0
    %211 = vmatpush1.msra.mxu0 0.0
    %212 = vmatprep.subr.mxu0 0.0
    %213 = vmatpush1.msra.mxu0 0.0
    %214 = vmatprep.subr.mxu0 0.0
    %215 = vmatpush1.msra.mxu0 0.0
    %216 = vmatprep.subr.mxu0 0.0
    %217 = vmatpush1.msra.mxu0 0.0
    %218 = vmatprep.subr.mxu0 0.0
    %219 = vmatpush1.msra.mxu0 0.0
    %220 = vmatprep.subr.mxu0 0.0
    %221 = vmatpush1.msra.mxu0 0.0
    %222 = vmatprep.subr.mxu0 0.0
    %223 = vmatpush1.msra.mxu0 0.0
    %224 = vmatprep.subr.mxu0 0.0
    %225 = vmatpush1.msra.mxu0 0.0
    %226 = vmatprep.subr.mxu0 0.0
    %227 = vmatpush1.msra.mxu0 0.0
    %228 = vmatprep.subr.mxu0 0.0
    %229 = vmatpush1.msra.mxu0 0.0
    %230 = vmatprep.subr.mxu0 0.0
    %231 = vmatpush1.msra.mxu0 0.0
    %232 = vmatprep.subr.mxu0 0.0
    %233 = vmatpush1.msra.mxu0 0.0
    %234 = vmatprep.subr.mxu0 0.0
    %235 = vmatpush1.msra.mxu0 0.0
    %236 = vmatprep.subr.mxu0 0.0
    %237 = vmatpush1.msra.mxu0 0.0
    %238 = vmatprep.subr.mxu0 0.0
    %239 = vmatpush1.msra.mxu0 0.0
    %240 = vmatprep.subr.mxu0 0.0
    %241 = vmatpush1.msra.mxu0 0.0
    %242 = vmatprep.subr.mxu0 0.0
    %243 = vmatpush1.msra.mxu0 0.0
    %244 = vmatprep.subr.mxu0 0.0
    %245 = vmatpush1.msra.mxu0 0.0
    %246 = vmatprep.subr.mxu0 0.0
    %247 = vmatpush1.msra.mxu0 0.0
    %248 = vmatprep.subr.mxu0 0.0
    %249 = vmatpush1.msra.mxu0 0.0
    %250 = vmatprep.subr.mxu0 0.0
    %251 = vmatpush1.msra.mxu0 0.0
    %252 = vmatprep.subr.mxu0 0.0
    %253 = vmatpush1.msra.mxu0 0.0
    %254 = vmatprep.subr.mxu0 0.0
    %255 = vmatpush1.msra.mxu0 0.0
    %256 = vmatprep.subr.mxu0 0.0
    %257 = vmatpush1.msra.mxu0 0.0
    %258 = vmatprep.subr.mxu0 0.0
    %259 = vmatpush1.msra.mxu0 0.0
    %260 = vmatprep.subr.mxu0 0.0
    %261 = vmatpush1.msra.mxu0 0.0
    %262 = vmatprep.mubr.f32.mxu0 0.0
    %263 = vmatmul.mubr.f32.gmra.mrb[0].mxu0 %v196
    %v264 = vpop.f32.mrb[0].mxu0
    %v265 = vadd.f32 %v192, %v264
    %v266 = vpop.f32.mrb[0].mxu0
    %267 = vdwg.mxu0
    %v268 = vmul.f32 %v265, 0.01
    %v269 = vmax.f32 %v265, %v268
    %v270 = vld [vmem:[%s5] sm:$0xff]
    %v271 = vld [vmem:[%s5 + $0x8] sm:$0xff]
    %v272 = vld [vmem:[%s5 + $0x10] sm:$0xff]
    %v273 = vld [vmem:[%s5 + $0x18] sm:$0xff]
    %v274 = vld [vmem:[%s6] sm:$0x1]
    %v276 = vlaneseq
    %v277 = vshrl.u32 %v276, 7
    %v278 = vsub.s32 0, %v277
    %v279 = vrot.slane %v274, %v278
    %v282 = vsel %vm194, %v269, 0
    %284 = vmatprep.subr.mxu0 0.0
    %285 = vmatpush1.msra.mxu0 %v270
    %286 = vmatprep.subr.mxu0 0.0
    %287 = vmatpush1.msra.mxu0 %v271
    %288 = vmatprep.subr.mxu0 0.0
    %289 = vmatpush1.msra.mxu0 %v272
    %290 = vmatprep.subr.mxu0 0.0
    %291 = vmatpush1.msra.mxu0 %v273
    %292 = vmatprep.subr.mxu0 0.0
    %293 = vmatpush1.msra.mxu0 0.0
    %294 = vmatprep.subr.mxu0 0.0
    %295 = vmatpush1.msra.mxu0 0.0
    %296 = vmatprep.subr.mxu0 0.0
    %297 = vmatpush1.msra.mxu0 0.0
    %298 = vmatprep.subr.mxu0 0.0
    %299 = vmatpush1.msra.mxu0 0.0
    %300 = vmatprep.subr.mxu0 0.0
    %301 = vmatpush1.msra.mxu0 0.0
    %302 = vmatprep.subr.mxu0 0.0
    %303 = vmatpush1.msra.mxu0 0.0
    %304 = vmatprep.subr.mxu0 0.0
    %305 = vmatpush1.msra.mxu0 0.0
    %306 = vmatprep.subr.mxu0 0.0
    %307 = vmatpush1.msra.mxu0 0.0
    %308 = vmatprep.subr.mxu0 0.0
    %309 = vmatpush1.msra.mxu0 0.0
    %310 = vmatprep.subr.mxu0 0.0
    %311 = vmatpush1.msra.mxu0 0.0
    %312 = vmatprep.subr.mxu0 0.0
    %313 = vmatpush1.msra.mxu0 0.0
    %314 = vmatprep.subr.mxu0 0.0
    %315 = vmatpush1.msra.mxu0 0.0
    %316 = vmatprep.subr.mxu0 0.0
    %317 = vmatpush1.msra.mxu0 0.0
    %318 = vmatprep.subr.mxu0 0.0
    %319 = vmatpush1.msra.mxu0 0.0
    %320 = vmatprep.subr.mxu0 0.0
    %321 = vmatpush1.msra.mxu0 0.0
    %322 = vmatprep.subr.mxu0 0.0
    %323 = vmatpush1.msra.mxu0 0.0
    %324 = vmatprep.subr.mxu0 0.0
    %325 = vmatpush1.msra.mxu0 0.0
    %326 = vmatprep.subr.mxu0 0.0
    %327 = vmatpush1.msra.mxu0 0.0
    %328 = vmatprep.subr.mxu0 0.0
    %329 = vmatpush1.msra.mxu0 0.0
    %330 = vmatprep.subr.mxu0 0.0
    %331 = vmatpush1.msra.mxu0 0.0
    %332 = vmatprep.subr.mxu0 0.0
    %333 = vmatpush1.msra.mxu0 0.0
    %334 = vmatprep.subr.mxu0 0.0
    %335 = vmatpush1.msra.mxu0 0.0
    %336 = vmatprep.subr.mxu0 0.0
    %337 = vmatpush1.msra.mxu0 0.0
    %338 = vmatprep.subr.mxu0 0.0
    %339 = vmatpush1.msra.mxu0 0.0
    %340 = vmatprep.subr.mxu0 0.0
    %341 = vmatpush1.msra.mxu0 0.0
    %342 = vmatprep.subr.mxu0 0.0
    %343 = vmatpush1.msra.mxu0 0.0
    %344 = vmatprep.subr.mxu0 0.0
    %345 = vmatpush1.msra.mxu0 0.0
    %346 = vmatprep.subr.mxu0 0.0
    %347 = vmatpush1.msra.mxu0 0.0
    %348 = vmatprep.mubr.f32.mxu0 0.0
    %349 = vmatmul.mubr.f32.gmra.mrb[0].mxu0 %v282
    %v350 = vpop.f32.mrb[0].mxu0
    %v351 = vadd.f32 %v279, %v350
    %v352 = vpop.f32.mrb[0].mxu0
    %353 = vdwg.mxu0
    %v354 = vmul.f32 %v351, 0.01
    %v355 = vmax.f32 %v351, %v354
    %v356 = vld [vmem:[#allocation6] sm:$0xff]
    %v357 = vld [vmem:[#allocation6 + $0x8] sm:$0xff]
    %v358 = vld [vmem:[#allocation6 + $0x10] sm:$0xff]
    %v359 = vld [vmem:[#allocation6 + $0x18] sm:$0xff]
    %v360 = vld [vmem:[%s8] sm:$0x1]
    %v362 = vlaneseq
    %v363 = vshrl.u32 %v362, 7
    %v364 = vsub.s32 0, %v363
    %v365 = vrot.slane %v360, %v364
    %v368 = vsel %vm194, %v355, 0
    %370 = vmatprep.subr.mxu0 0.0
    %371 = vmatpush1.msra.mxu0 %v356
    %372 = vmatprep.subr.mxu0 0.0
    %373 = vmatpush1.msra.mxu0 %v357
    %374 = vmatprep.subr.mxu0 0.0
    %375 = vmatpush1.msra.mxu0 %v358
    %376 = vmatprep.subr.mxu0 0.0
    %377 = vmatpush1.msra.mxu0 %v359
    %378 = vmatprep.subr.mxu0 0.0
    %379 = vmatpush1.msra.mxu0 0.0
    %380 = vmatprep.subr.mxu0 0.0
    %381 = vmatpush1.msra.mxu0 0.0
    %382 = vmatprep.subr.mxu0 0.0
    %383 = vmatpush1.msra.mxu0 0.0
    %384 = vmatprep.subr.mxu0 0.0
    %385 = vmatpush1.msra.mxu0 0.0
    %386 = vmatprep.subr.mxu0 0.0
    %387 = vmatpush1.msra.mxu0 0.0
    %388 = vmatprep.subr.mxu0 0.0
    %389 = vmatpush1.msra.mxu0 0.0
    %390 = vmatprep.subr.mxu0 0.0
    %391 = vmatpush1.msra.mxu0 0.0
    %392 = vmatprep.subr.mxu0 0.0
    %393 = vmatpush1.msra.mxu0 0.0
    %394 = vmatprep.subr.mxu0 0.0
    %395 = vmatpush1.msra.mxu0 0.0
    %396 = vmatprep.subr.mxu0 0.0
    %397 = vmatpush1.msra.mxu0 0.0
    %398 = vmatprep.subr.mxu0 0.0
    %399 = vmatpush1.msra.mxu0 0.0
    %400 = vmatprep.subr.mxu0 0.0
    %401 = vmatpush1.msra.mxu0 0.0
    %402 = vmatprep.subr.mxu0 0.0
    %403 = vmatpush1.msra.mxu0 0.0
    %404 = vmatprep.subr.mxu0 0.0
    %405 = vmatpush1.msra.mxu0 0.0
    %406 = vmatprep.subr.mxu0 0.0
    %407 = vmatpush1.msra.mxu0 0.0
    %408 = vmatprep.subr.mxu0 0.0
    %409 = vmatpush1.msra.mxu0 0.0
    %410 = vmatprep.subr.mxu0 0.0
    %411 = vmatpush1.msra.mxu0 0.0
    %412 = vmatprep.subr.mxu0 0.0
    %413 = vmatpush1.msra.mxu0 0.0
    %414 = vmatprep.subr.mxu0 0.0
    %415 = vmatpush1.msra.mxu0 0.0
    %416 = vmatprep.subr.mxu0 0.0
    %417 = vmatpush1.msra.mxu0 0.0
    %418 = vmatprep.subr.mxu0 0.0
    %419 = vmatpush1.msra.mxu0 0.0
    %420 = vmatprep.subr.mxu0 0.0
    %421 = vmatpush1.msra.mxu0 0.0
    %422 = vmatprep.subr.mxu0 0.0
    %423 = vmatpush1.msra.mxu0 0.0
    %424 = vmatprep.subr.mxu0 0.0
    %425 = vmatpush1.msra.mxu0 0.0
    %426 = vmatprep.subr.mxu0 0.0
    %427 = vmatpush1.msra.mxu0 0.0
    %428 = vmatprep.subr.mxu0 0.0
    %429 = vmatpush1.msra.mxu0 0.0
    %430 = vmatprep.subr.mxu0 0.0
    %431 = vmatpush1.msra.mxu0 0.0
    %432 = vmatprep.subr.mxu0 0.0
    %433 = vmatpush1.msra.mxu0 0.0
    %434 = vmatprep.mubr.f32.mxu0 0.0
    %435 = vmatmul.mubr.f32.gmra.mrb[0].mxu0 %v368
    %v436 = vpop.f32.mrb[0].mxu0
    %v437 = vadd.f32 %v365, %v436
    %v438 = vpop.f32.mrb[0].mxu0
    %439 = vdwg.mxu0
    %v440 = vmul.f32 %v437, 0.01
    %v441 = vmax.f32 %v437, %v440
    %v442 = vld [vmem:[#allocation7] sm:$0xff]
    %v443 = vld [vmem:[#allocation7 + $0x8] sm:$0xff]
    %v444 = vld [vmem:[#allocation7 + $0x10] sm:$0xff]
    %v445 = vld [vmem:[#allocation7 + $0x18] sm:$0xff]
    %v446 = vld [vmem:[%s10] sm:$0x1]
    %v448 = vlaneseq
    %v449 = vshrl.u32 %v448, 7
    %v450 = vsub.s32 0, %v449
    %v451 = vrot.slane %v446, %v450
    %v454 = vsel %vm194, %v441, 0
    %456 = vmatprep.subr.mxu0 0.0
    %457 = vmatpush1.msra.mxu0 %v442
    %458 = vmatprep.subr.mxu0 0.0
    %459 = vmatpush1.msra.mxu0 %v443
    %460 = vmatprep.subr.mxu0 0.0
    %461 = vmatpush1.msra.mxu0 %v444
    %462 = vmatprep.subr.mxu0 0.0
    %463 = vmatpush1.msra.mxu0 %v445
    %464 = vmatprep.subr.mxu0 0.0
    %465 = vmatpush1.msra.mxu0 0.0
    %466 = vmatprep.subr.mxu0 0.0
    %467 = vmatpush1.msra.mxu0 0.0
    %468 = vmatprep.subr.mxu0 0.0
    %469 = vmatpush1.msra.mxu0 0.0
    %470 = vmatprep.subr.mxu0 0.0
    %471 = vmatpush1.msra.mxu0 0.0
    %472 = vmatprep.subr.mxu0 0.0
    %473 = vmatpush1.msra.mxu0 0.0
    %474 = vmatprep.subr.mxu0 0.0
    %475 = vmatpush1.msra.mxu0 0.0
    %476 = vmatprep.subr.mxu0 0.0
    %477 = vmatpush1.msra.mxu0 0.0
    %478 = vmatprep.subr.mxu0 0.0
    %479 = vmatpush1.msra.mxu0 0.0
    %480 = vmatprep.subr.mxu0 0.0
    %481 = vmatpush1.msra.mxu0 0.0
    %482 = vmatprep.subr.mxu0 0.0
    %483 = vmatpush1.msra.mxu0 0.0
    %484 = vmatprep.subr.mxu0 0.0
    %485 = vmatpush1.msra.mxu0 0.0
    %486 = vmatprep.subr.mxu0 0.0
    %487 = vmatpush1.msra.mxu0 0.0
    %488 = vmatprep.subr.mxu0 0.0
    %489 = vmatpush1.msra.mxu0 0.0
    %490 = vmatprep.subr.mxu0 0.0
    %491 = vmatpush1.msra.mxu0 0.0
    %492 = vmatprep.subr.mxu0 0.0
    %493 = vmatpush1.msra.mxu0 0.0
    %494 = vmatprep.subr.mxu0 0.0
    %495 = vmatpush1.msra.mxu0 0.0
    %496 = vmatprep.subr.mxu0 0.0
    %497 = vmatpush1.msra.mxu0 0.0
    %498 = vmatprep.subr.mxu0 0.0
    %499 = vmatpush1.msra.mxu0 0.0
    %500 = vmatprep.subr.mxu0 0.0
    %501 = vmatpush1.msra.mxu0 0.0
    %502 = vmatprep.subr.mxu0 0.0
    %503 = vmatpush1.msra.mxu0 0.0
    %504 = vmatprep.subr.mxu0 0.0
    %505 = vmatpush1.msra.mxu0 0.0
    %506 = vmatprep.subr.mxu0 0.0
    %507 = vmatpush1.msra.mxu0 0.0
    %508 = vmatprep.subr.mxu0 0.0
    %509 = vmatpush1.msra.mxu0 0.0
    %510 = vmatprep.subr.mxu0 0.0
    %511 = vmatpush1.msra.mxu0 0.0
    %512 = vmatprep.subr.mxu0 0.0
    %513 = vmatpush1.msra.mxu0 0.0
    %514 = vmatprep.subr.mxu0 0.0
    %515 = vmatpush1.msra.mxu0 0.0
    %516 = vmatprep.subr.mxu0 0.0
    %517 = vmatpush1.msra.mxu0 0.0
    %518 = vmatprep.subr.mxu0 0.0
    %519 = vmatpush1.msra.mxu0 0.0
    %520 = vmatprep.mubr.f32.mxu0 0.0
    %521 = vmatmul.mubr.f32.gmra.mrb[0].mxu0 %v454
    %v522 = vpop.f32.mrb[0].mxu0
    %v523 = vadd.f32 %v451, %v522
    %v524 = vpop.f32.mrb[0].mxu0
    %525 = vdwg.mxu0
    %v526 = vmul.f32 %v523, 0.01
    %v527 = vmax.f32 %v523, %v526
    %v528 = vld [vmem:[%s11] sm:$0xff]
    %v529 = vld [vmem:[%s11 + $0x8] sm:$0xff]
    %v530 = vld [vmem:[%s11 + $0x10] sm:$0xff]
    %v531 = vld [vmem:[%s11 + $0x18] sm:$0xff]
    %v532 = vld [vmem:[%s12] sm:$0x1]
    %v534 = vlaneseq
    %v535 = vshrl.u32 %v534, 7
    %v536 = vsub.s32 0, %v535
    %v537 = vrot.slane %v532, %v536
    %v540 = vsel %vm194, %v527, 0
    %542 = vmatprep.subr.mxu0 0.0
    %543 = vmatpush1.msra.mxu0 %v528
    %544 = vmatprep.subr.mxu0 0.0
    %545 = vmatpush1.msra.mxu0 %v529
    %546 = vmatprep.subr.mxu0 0.0
    %547 = vmatpush1.msra.mxu0 %v530
    %548 = vmatprep.subr.mxu0 0.0
    %549 = vmatpush1.msra.mxu0 %v531
    %550 = vmatprep.subr.mxu0 0.0
    %551 = vmatpush1.msra.mxu0 0.0
    %552 = vmatprep.subr.mxu0 0.0
    %553 = vmatpush1.msra.mxu0 0.0
    %554 = vmatprep.subr.mxu0 0.0
    %555 = vmatpush1.msra.mxu0 0.0
    %556 = vmatprep.subr.mxu0 0.0
    %557 = vmatpush1.msra.mxu0 0.0
    %558 = vmatprep.subr.mxu0 0.0
    %559 = vmatpush1.msra.mxu0 0.0
    %560 = vmatprep.subr.mxu0 0.0
    %561 = vmatpush1.msra.mxu0 0.0
    %562 = vmatprep.subr.mxu0 0.0
    %563 = vmatpush1.msra.mxu0 0.0
    %564 = vmatprep.subr.mxu0 0.0
    %565 = vmatpush1.msra.mxu0 0.0
    %566 = vmatprep.subr.mxu0 0.0
    %567 = vmatpush1.msra.mxu0 0.0
    %568 = vmatprep.subr.mxu0 0.0
    %569 = vmatpush1.msra.mxu0 0.0
    %570 = vmatprep.subr.mxu0 0.0
    %571 = vmatpush1.msra.mxu0 0.0
    %572 = vmatprep.subr.mxu0 0.0
    %573 = vmatpush1.msra.mxu0 0.0
    %574 = vmatprep.subr.mxu0 0.0
    %575 = vmatpush1.msra.mxu0 0.0
    %576 = vmatprep.subr.mxu0 0.0
    %577 = vmatpush1.msra.mxu0 0.0
    %578 = vmatprep.subr.mxu0 0.0
    %579 = vmatpush1.msra.mxu0 0.0
    %580 = vmatprep.subr.mxu0 0.0
    %581 = vmatpush1.msra.mxu0 0.0
    %582 = vmatprep.subr.mxu0 0.0
    %583 = vmatpush1.msra.mxu0 0.0
    %584 = vmatprep.subr.mxu0 0.0
    %585 = vmatpush1.msra.mxu0 0.0
    %586 = vmatprep.subr.mxu0 0.0
    %587 = vmatpush1.msra.mxu0 0.0
    %588 = vmatprep.subr.mxu0 0.0
    %589 = vmatpush1.msra.mxu0 0.0
    %590 = vmatprep.subr.mxu0 0.0
    %591 = vmatpush1.msra.mxu0 0.0
    %592 = vmatprep.subr.mxu0 0.0
    %593 = vmatpush1.msra.mxu0 0.0
    %594 = vmatprep.subr.mxu0 0.0
    %595 = vmatpush1.msra.mxu0 0.0
    %596 = vmatprep.subr.mxu0 0.0
    %597 = vmatpush1.msra.mxu0 0.0
    %598 = vmatprep.subr.mxu0 0.0
    %599 = vmatpush1.msra.mxu0 0.0
    %600 = vmatprep.subr.mxu0 0.0
    %601 = vmatpush1.msra.mxu0 0.0
    %602 = vmatprep.subr.mxu0 0.0
    %603 = vmatpush1.msra.mxu0 0.0
    %604 = vmatprep.subr.mxu0 0.0
    %605 = vmatpush1.msra.mxu0 0.0
    %606 = vmatprep.mubr.f32.mxu0 0.0
    %607 = vmatmul.mubr.f32.gmra.mrb[0].mxu0 %v540
    %v608 = vpop.f32.mrb[0].mxu0
    %v609 = vadd.f32 %v537, %v608
    %v610 = vpop.f32.mrb[0].mxu0
    %611 = vdwg.mxu0
    %vm612 = vcmask 31744
    %613 = vst.msk [vmem:[%s13] sm:$0xff] %vm612, %v609
    // Predicated region
    $region70: #{net_forward.1} parent=1 // pred_check
      _
    $region71: #{net_forward.1} parent=1 // pred_check_branch
      %615 = sbr.rel (0) target = $region73
    $region72: #{net_forward.1} parent=1 // pred_region
      _
    $region73: #{net_forward.1} parent=1 // pred_fallthru
      _
    // Predicated region
    $region74: #{net_forward.1} parent=1 // pred_check
      _
    $region75: #{net_forward.1} parent=1 // pred_check_branch
      %617 = sbr.rel (0) target = $region77
    $region76: #{net_forward.1} parent=1 // pred_region
      _
    $region77: #{net_forward.1} parent=1 // pred_fallthru
      _
    %618 = vsyncpa [#allocation3], 1
    %619 = vsyncpa [#allocation5], 1
    %620 = vsyncpa [#allocation8], 1

</llo_original>
